<compile_context>
chip_gen: v7x
topology: tpu7x:2x2x1
jax: 0.10.0
libtpu: 0.0.40
codegen_flags: <defaults>
</compile_context>

<pallas_src>
import math

import jax
import jax.numpy as jnp
from jax import lax
from jax.experimental import pallas as pl
from jax.experimental.pallas import tpu as pltpu


_DEFAULT_VMEM_CAP = 64 * 1024 * 1024  # v7x per-core VMEM (the smallest)


def _vmem_capacity_bytes():
    try:
        info = pltpu.get_tpu_info()
        cap = int(getattr(info, "vmem_capacity_bytes", _DEFAULT_VMEM_CAP))
        return cap if cap > 0 else _DEFAULT_VMEM_CAP
    except Exception:
        return _DEFAULT_VMEM_CAP


def _make_gather_kernel(k_total: int, chunked: bool):
    """Build the select-accumulate kernel.

    x_ref:   (TK, TI)  source rows for this K chunk (gather axis on sublanes)
    idx_ref: (TM, TI)  int32 indices (possibly negative -> wrapped here)
    o_ref:   (TM, TI)  output (accumulated across K chunks when `chunked`)
    """

    def kernel(x_ref, idx_ref, o_ref):
        TK, TI = x_ref.shape
        TM = idx_ref.shape[0]
        dt = x_ref.dtype
        itemsize = jnp.dtype(dt).itemsize
        pack = max(1, 4 // itemsize)
        kc = 8 * pack        # x rows per inner chunk  (one sublane group)
        SM = 8 * pack        # output rows per strip   (one sublane group)

        if chunked:
            kk = pl.program_id(3)
            k_base = kk * TK

            @pl.when(kk == 0)
            def _():
                o_ref[...] = jnp.zeros_like(o_ref)
        else:
            k_base = 0

        n_kchunks = TK // kc
        k_tail = TK - n_kchunks * kc

        def run_strip(r0, rows):
            # Live set per strip: idx (rows, TI) i32 + acc (rows, TI) native
            # dtype + one (kc, TI) x chunk -> comfortably inside the vreg file.
            idx = idx_ref[pl.ds(r0, rows), :]
            idx = jnp.where(idx < 0, idx + k_total, idx)  # ONNX negative idx

            if chunked:
                acc = o_ref[pl.ds(r0, rows), :]
            else:
                acc = jnp.zeros((rows, TI), dtype=dt)

            def chunk_body(c, acc):
                base = pl.multiple_of(c * kc, kc)
                xc = x_ref[pl.ds(base, kc), :]            # (kc, TI)
                for j in range(kc):                        # static row extracts
                    acc = jnp.where(idx == k_base + c * kc + j,
                                    xc[j:j + 1, :], acc)
                return acc

            if n_kchunks > 0:
                acc = lax.fori_loop(0, n_kchunks, chunk_body, acc)

            if k_tail > 0:                                 # static tail, 1 load
                xt = x_ref[pl.ds(n_kchunks * kc, k_tail), :]
                for j in range(k_tail):
                    acc = jnp.where(idx == k_base + n_kchunks * kc + j,
                                    xt[j:j + 1, :], acc)

            o_ref[pl.ds(r0, rows), :] = acc

        n_strips = TM // SM
        tail_rows = TM - n_strips * SM

        if n_strips > 0:
            @pl.loop(0, n_strips)
            def _(s):
                run_strip(pl.multiple_of(s * SM, SM), SM)

        if tail_rows > 0:
            run_strip(n_strips * SM, tail_rows)

    return kernel


def _pick_tile(n, align, preferred):
    """Largest legal tile: the full extent if the dim is small, otherwise a
    multiple of `align` (preferring one that divides `n`)."""
    if n <= preferred:
        return n
    best = max(align, (preferred // align) * align)
    for cand in range(best, align - 1, -align):
        if n % cand == 0:
            return cand
    return best


def _gather3d(x3, idx3):
    outer, K, inner = x3.shape
    M = idx3.shape[1]
    dt = x3.dtype
    itemsize = jnp.dtype(dt).itemsize
    pack = max(1, 4 // itemsize)
    kc = 8 * pack

    vmem_cap = _vmem_capacity_bytes()
    vmem_limit = max(32 * 1024 * 1024,
                     min((vmem_cap * 3) // 4, 112 * 1024 * 1024))
    x_budget = vmem_cap // 4  # budget for the double-buffered (TK, TI) x tile

    # Lane tile: as wide as the x budget and per-strip vreg pressure allow.
    ti_cap = x_budget // max(1, 2 * K * itemsize)
    ti_pref = max(128, min(min(1024, 2048 // pack), (ti_cap // 128) * 128))
    TI = _pick_tile(inner, 128, ti_pref)

    # Output-row tile: multiple of the dtype's sublane group (= strip size).
    TM = _pick_tile(M, 8 * pack, 256)

    # K chunking: keep the double-buffered x tile inside the VMEM budget.
    if 2 * K * TI * itemsize <= x_budget:
        TK = K
    else:
        TK = max(kc, ((x_budget // (2 * TI * itemsize)) // kc) * kc)
        TK = min(TK, K)
    chunked = TK < K

    n_ti = pl.cdiv(inner, TI)
    n_tm = pl.cdiv(M, TM)
    n_tk = pl.cdiv(K, TK)

    # Lead with the larger parallel extent (v7x megacore); keep M just before
    # the K axis so the x tile is reused across M steps without re-DMA.
    if n_ti >= outer:
        grid = (n_ti, outer, n_tm, n_tk)
        x_map = lambda ti, o, tm, kk: (o, kk, ti)
        io_map = lambda ti, o, tm, kk: (o, tm, ti)
    else:
        grid = (outer, n_ti, n_tm, n_tk)
        x_map = lambda o, ti, tm, kk: (o, kk, ti)
        io_map = lambda o, ti, tm, kk: (o, tm, ti)

    kernel = _make_gather_kernel(K, chunked)

    return pl.pallas_call(
        kernel,
        out_shape=jax.ShapeDtypeStruct((outer, M, inner), dt),
        grid_spec=pltpu.PrefetchScalarGridSpec(
            num_scalar_prefetch=0,
            grid=grid,
            in_specs=[
                pl.BlockSpec((pl.Squeezed(), TK, TI), x_map),
                pl.BlockSpec((pl.Squeezed(), TM, TI), io_map),
            ],
            out_specs=pl.BlockSpec((pl.Squeezed(), TM, TI), io_map),
        ),
        compiler_params=pltpu.CompilerParams(
            dimension_semantics=("parallel", "parallel", "parallel", "arbitrary"),
            vmem_limit_bytes=int(vmem_limit),
        ),
    )(x3, idx3)


def onnx_gather_elements(x, indices, axis=0):
    """JAX/Pallas equivalent of torch.gather(x, dim=axis, index=indices)."""
    ndim = x.ndim
    axis = axis % ndim

    # torch.gather permits indices.shape[d] <= x.shape[d] for d != axis; only
    # the leading [0, indices.shape[d]) window is addressable, so slice it.
    slices = tuple(
        slice(None) if d == axis else slice(0, indices.shape[d]) for d in range(ndim)
    )
    x = x[slices]

    K = x.shape[axis]
    M = indices.shape[axis]
    outer = math.prod(x.shape[:axis])
    inner = math.prod(x.shape[axis + 1:])

    if 0 in (outer, K, inner, M):
        return jnp.zeros(indices.shape, dtype=x.dtype)

    idx = indices.astype(jnp.int32)
    x3 = x.reshape(outer, K, inner)
    idx3 = idx.reshape(outer, M, inner)

    if inner < 128 and outer > 1:
        # Lane packing: fold the batch dims onto lanes so loads/stores are
        # lane-dense (covers last-axis gathers and any small `inner`).
        x3 = jnp.transpose(x3, (1, 0, 2)).reshape(1, K, outer * inner)
        idx3 = jnp.transpose(idx3, (1, 0, 2)).reshape(1, M, outer * inner)
        out3 = _gather3d(x3, idx3)
        out = jnp.transpose(out3.reshape(M, outer, inner), (1, 0, 2))
    else:
        out = _gather3d(x3, idx3)

    return out.reshape(indices.shape)


class OnnxGatherElements:
    """Mirror of the PyTorch module: forward(x, indices) -> gather along axis."""

    def __init__(self, axis: int = 0):
        self.axis = axis

    def __call__(self, input_tensor, indices):
        return onnx_gather_elements(input_tensor, indices, axis=self.axis)


if __name__ == "__main__":
    key = jax.random.PRNGKey(0)
    kx, ki, kx2, ki2, ki3 = jax.random.split(key, 5)

    # 1) NCHW-like tensors; gather along the channel axis (axis=1).
    x = jax.random.normal(kx, (2, 4, 16, 16), dtype=jnp.float32)
    indices = jax.random.randint(ki, (2, 4, 16, 16), 0, 4, dtype=jnp.int32)
    out = jax.block_until_ready(OnnxGatherElements(axis=1)(x, indices))
    ref = jnp.take_along_axis(x, indices, axis=1)
    assert out.shape == indices.shape
    assert jnp.allclose(out, ref), "axis=1 mismatch vs take_along_axis"

    # 2) Last-axis gather with negative (ONNX-style) indices -> lane-packed path.
    x2 = jax.random.normal(kx2, (2, 4, 8, 32), dtype=jnp.float32)
    idx2 = jax.random.randint(ki2, (2, 4, 8, 32), -32, 32, dtype=jnp.int32)
    out2 = jax.block_until_ready(OnnxGatherElements(axis=-1)(x2, idx2))
    ref2 = jnp.take_along_axis(x2, jnp.where(idx2 < 0, idx2 + 32, idx2), axis=-1)
    assert out2.shape == idx2.shape
    assert jnp.allclose(out2, ref2), "axis=-1 mismatch vs take_along_axis"

    # 3) axis=0 gather with a longer output than input along the gather axis
    #    (exercises outer == 1 and the sub-sublane-group tail strip).
    idx_ax0 = jax.random.randint(ki3, (3, 4, 16, 16), 0, 2, dtype=jnp.int32)
    out3 = jax.block_until_ready(OnnxGatherElements(axis=0)(x, idx_ax0))
    ref3 = jnp.take_along_axis(x, idx_ax0, axis=0)
    assert out3.shape == idx_ax0.shape
    assert jnp.allclose(out3, ref3), "axis=0 mismatch vs take_along_axis"

    print("KERNEL_OK")
</pallas_src>

<mosaic_0001>
module attributes {stable_mosaic.version = 11 : i64} {
  func.func @kernel(%arg0: i32, %arg1: i32, %arg2: i32, %arg3: i32, %arg4: memref<1x4x256xf32, #tpu.memory_space<vmem>>, %arg5: memref<1x4x256xi32, #tpu.memory_space<vmem>>, %arg6: memref<1x4x256xf32, #tpu.memory_space<vmem>>) attributes {dimension_semantics = [#tpu.dimension_semantics<parallel>, #tpu.dimension_semantics<parallel>, #tpu.dimension_semantics<parallel>, #tpu.dimension_semantics<arbitrary>], iteration_bounds = array<i64: 2, 1, 1, 1>, scalar_prefetch = 0 : i64, scratch_operands = 0 : i64, tpu.core_type = #tpu.core_type<tc>, window_params = [{transform_indices = @transform_0, window_bounds = array<i64: 1, 4, 256>}, {transform_indices = @transform_1, window_bounds = array<i64: 1, 4, 256>}, {transform_indices = @transform_2, window_bounds = array<i64: 1, 4, 256>}]} {
    %c0 = arith.constant 0 : index
    %c0_0 = arith.constant 0 : index
    %c0_1 = arith.constant 0 : index
    %0 = vector.load %arg5[%c0, %c0_0, %c0_1] : memref<1x4x256xi32, #tpu.memory_space<vmem>>, vector<1x4x256xi32>
    %1 = vector.shape_cast %0 : vector<1x4x256xi32> to vector<4x256xi32>
    %c0_i32 = arith.constant 0 : i32
    %2 = vector.broadcast %c0_i32 : i32 to vector<4x256xi32>
    %3 = arith.cmpi slt, %1, %2 : vector<4x256xi32>
    %c4_i32 = arith.constant 4 : i32
    %4 = vector.broadcast %c4_i32 : i32 to vector<4x256xi32>
    %5 = arith.addi %1, %4 : vector<4x256xi32>
    %6 = arith.select %3, %5, %1 : vector<4x256xi1>, vector<4x256xi32>
    %cst = arith.constant 0.000000e+00 : f32
    %7 = vector.broadcast %cst : f32 to vector<4x256xf32>
    %c0_2 = arith.constant 0 : index
    %c0_3 = arith.constant 0 : index
    %c0_4 = arith.constant 0 : index
    %8 = vector.load %arg4[%c0_2, %c0_3, %c0_4] : memref<1x4x256xf32, #tpu.memory_space<vmem>>, vector<1x4x256xf32>
    %9 = vector.shape_cast %8 : vector<1x4x256xf32> to vector<4x256xf32>
    %c0_i32_5 = arith.constant 0 : i32
    %10 = vector.broadcast %c0_i32_5 : i32 to vector<4x256xi32>
    %11 = arith.cmpi eq, %6, %10 : vector<4x256xi32>
    %12 = vector.extract_strided_slice %9 {offsets = [0, 0], sizes = [1, 256], strides = [1, 1]} : vector<4x256xf32> to vector<1x256xf32>
    %13 = vector.shape_cast %12 : vector<1x256xf32> to vector<1x256xf32>
    %14 = vector.broadcast %13 : vector<1x256xf32> to vector<4x256xf32>
    %15 = arith.select %11, %14, %7 : vector<4x256xi1>, vector<4x256xf32>
    %c1_i32 = arith.constant 1 : i32
    %16 = vector.broadcast %c1_i32 : i32 to vector<4x256xi32>
    %17 = arith.cmpi eq, %6, %16 : vector<4x256xi32>
    %18 = vector.extract_strided_slice %9 {offsets = [1, 0], sizes = [1, 256], strides = [1, 1]} : vector<4x256xf32> to vector<1x256xf32>
    %19 = vector.shape_cast %18 : vector<1x256xf32> to vector<1x256xf32>
    %20 = vector.broadcast %19 : vector<1x256xf32> to vector<4x256xf32>
    %21 = arith.select %17, %20, %15 : vector<4x256xi1>, vector<4x256xf32>
    %c2_i32 = arith.constant 2 : i32
    %22 = vector.broadcast %c2_i32 : i32 to vector<4x256xi32>
    %23 = arith.cmpi eq, %6, %22 : vector<4x256xi32>
    %24 = vector.extract_strided_slice %9 {offsets = [2, 0], sizes = [1, 256], strides = [1, 1]} : vector<4x256xf32> to vector<1x256xf32>
    %25 = vector.shape_cast %24 : vector<1x256xf32> to vector<1x256xf32>
    %26 = vector.broadcast %25 : vector<1x256xf32> to vector<4x256xf32>
    %27 = arith.select %23, %26, %21 : vector<4x256xi1>, vector<4x256xf32>
    %c3_i32 = arith.constant 3 : i32
    %28 = vector.broadcast %c3_i32 : i32 to vector<4x256xi32>
    %29 = arith.cmpi eq, %6, %28 : vector<4x256xi32>
    %30 = vector.extract_strided_slice %9 {offsets = [3, 0], sizes = [1, 256], strides = [1, 1]} : vector<4x256xf32> to vector<1x256xf32>
    %31 = vector.shape_cast %30 : vector<1x256xf32> to vector<1x256xf32>
    %32 = vector.broadcast %31 : vector<1x256xf32> to vector<4x256xf32>
    %33 = arith.select %29, %32, %27 : vector<4x256xi1>, vector<4x256xf32>
    %c0_6 = arith.constant 0 : index
    %c0_7 = arith.constant 0 : index
    %c0_8 = arith.constant 0 : index
    %34 = vector.load %arg6[%c0_6, %c0_7, %c0_8] : memref<1x4x256xf32, #tpu.memory_space<vmem>>, vector<1x4x256xf32>
    %35 = vector.shape_cast %34 : vector<1x4x256xf32> to vector<4x256xf32>
    %36 = vector.shape_cast %33 : vector<4x256xf32> to vector<1x4x256xf32>
    tpu.vector_store %arg6[%c0_6, %c0_7, %c0_8], %36 {strides = array<i32>} : memref<1x4x256xf32, #tpu.memory_space<vmem>>, vector<1x4x256xf32>,
    return
  }
  func.func @transform_0(%arg0: i32, %arg1: i32, %arg2: i32, %arg3: i32) -> (i32, i32, i32) {
    %c0_i32 = arith.constant 0 : i32
    return %arg0, %arg3, %arg1 : i32, i32, i32
  }
  func.func @transform_1(%arg0: i32, %arg1: i32, %arg2: i32, %arg3: i32) -> (i32, i32, i32) {
    %c0_i32 = arith.constant 0 : i32
    return %arg0, %arg2, %arg1 : i32, i32, i32
  }
  func.func @transform_2(%arg0: i32, %arg1: i32, %arg2: i32, %arg3: i32) -> (i32, i32, i32) {
    %c0_i32 = arith.constant 0 : i32
    return %arg0, %arg2, %arg1 : i32, i32, i32
  }
}

</mosaic_0001>

<llo_original>
// kernel: tpu_custom_call.1
$region0: #{tpu_custom_call.1}
  #allocation0 [shape = 'u32[]', space=smem, size = 0x4, offset = 0x4, fixed_abs, tag = 'smem constant byte address 0x4 - core index']
  #allocation1 [shape = 'u32[144,128]{1,0:T(1,128)}', space=vmem, size = 0x12000, scoped, tag = 'internal scratch']
  %s0 = inlined_call_operand.hbm [shape: f32[2,4,256], index: 0, kind: input, shape index: {}]
  %s1 = inlined_call_operand.hbm [shape: s32[2,4,256], index: 1, kind: input, shape index: {}]
  %s2 = inlined_call_operand.hbm [shape: f32[2,4,256], index: 2, kind: output, shape index: {}]
  %s3 = sld [smem:[#allocation0]]
  $region49: #{tpu_custom_call.1} parent=0
    _
  %s5 = ssub.s32 1, %s3
  %s6 = scalar_select 0, %s5, %s3
  $region1: #{tpu_custom_call.1} parent=0
    #allocation2 [shape = 'u8[8192]{0}', space=vmem, size = 0x2000, scoped, tag = 'input window, operand 0']
    #allocation3 [shape = 's32[2]{0}', space=sflag, size = 0x8, scoped, tag = 'scoped memory for tpu_custom_call.1']
    #allocation4 [shape = 's32[2]{0}', space=sflag, size = 0x8, scoped, tag = 'scoped memory for tpu_custom_call.1']
    #allocation5 [shape = 'u8[8192]{0}', space=vmem, size = 0x2000, scoped, tag = 'input window, operand 1']
    #allocation6 [shape = 's32[2]{0}', space=sflag, size = 0x8, scoped, tag = 'scoped memory for tpu_custom_call.1']
    #allocation7 [shape = 'u8[8192]{0}', space=vmem, size = 0x2000, scoped, tag = 'output window, operand 0']
    %7 = vsyncpa [#allocation3], 0
    %s8 = scalar_lea.sflag [#allocation3], 1
    %9 = vsyncpa %s8, 0
    %10 = vsyncpa [#allocation6], 0
    %s11 = scalar_lea.sflag [#allocation6], 1
    %12 = vsyncpa %s11, 0
    %13 = vsyncpa [#allocation4], 0
    %s14 = scalar_lea.sflag [#allocation4], 1
    %15 = vsyncpa %s14, 0
    loop: start=0, step=1, limit=4
    $region2: #{tpu_custom_call.1} parent=1 // loop_pre_header
      _
    $region3: #{tpu_custom_call.1} parent=1 // loop_header
      %s17 = sphi 0, %s21
      %p18 = scmp.ge.s32.totalorder %s17, 4
      %s24 = sphi 0, %s50
      %s25 = sphi 0, %s46
      %s26 = sphi 0, %s42
      %s27 = sphi 0, %s38
      %s28 = sphi 0, %s24
      %s29 = sphi 0, %s25
      %s30 = sphi 0, %s26
      %s31 = sphi 0, %s27
      %s32 = sphi 0, %s28
      %s33 = sphi 0, %s29
      %s34 = sphi 0, %s30
      %s35 = sphi 0, %s31
      %s57 = sphi 0, %s59
      %s60 = sphi 0, %s57
      %s61 = sphi 0, %s60
      %s77 = sphi 0, %s61
      %s87 = sphi 0, %s89
      %s90 = sphi 0, %s87
      %s91 = sphi 0, %s90
      %s107 = sphi 0, %s91
      %s117 = sphi 0, %s119
      %s120 = sphi 0, %s117
      %s121 = sphi 0, %s120
      %s137 = sphi 0, %s121
    $region4: #{tpu_custom_call.1} parent=1 // loop_header_branch
      %20 = sbr.rel (%p18) target = $region8
    $region5: #{tpu_custom_call.1} parent=1 // loop_body
      %s22 = ssub.s32 %s17, 1
      %s23 = ssub.s32 %s17, 2
      %s36 = sadd.s32 1, %s27
      %p37 = scmp.ge.s32.totalorder %s36, 1
      %s38 = scalar_select %p37, 0, %s36
      %s39 = sadd.s32 1, %s26
      %s40 = scalar_select %p37, %s39, %s26
      %p41 = scmp.ge.s32.totalorder %s40, 1
      %s42 = scalar_select %p41, 0, %s40
      %s43 = sadd.s32 1, %s25
      %s44 = scalar_select %p41, %s43, %s25
      %p45 = scmp.ge.s32.totalorder %s44, 1
      %s46 = scalar_select %p45, 0, %s44
      %s47 = sadd.s32 1, %s24
      %s48 = scalar_select %p45, %s47, %s24
      %p49 = scmp.ge.s32.totalorder %s48, 2
      %s50 = scalar_select %p49, 0, %s48
      %s51 = ssub.s32 %s24, %s50
      %s52 = ssub.s32 %s27, %s38
      %s53 = sor.u32 %s51, %s52
      %s54 = ssub.s32 %s25, %s46
      %s55 = sor.u32 %s53, %s54
      %p56 = scmp.eq.s32.totalorder %s55, 0
      %s58 = sadd.s32 %s57, 1
      %s59 = scalar_select %p56, %s57, %s58
      %p62 = pneg %p56
      %p63 = scmp.eq.s32.totalorder %s17, 1
      %p64 = por %p62, %p63
      %p65 = scmp.ne.s32.totalorder %s57, %s60
      %p66 = scmp.eq.s32.totalorder %s17, 0
      %p67 = por %p65, %p66
      %p68 = scmp.ne.s32.totalorder %s57, %s60
      %p69 = scmp.eq.s32.totalorder %s22, 1
      %p70 = por %p68, %p69
      %p71 = scmp.ne.s32.totalorder %s60, %s61
      %p72 = scmp.eq.s32.totalorder %s22, 0
      %p73 = por %p71, %p72
      %p74 = scmp.ne.s32.totalorder %s60, %s61
      %p75 = scmp.eq.s32.totalorder %s23, 1
      %p76 = por %p74, %p75
      %p78 = scmp.ne.s32.totalorder %s61, %s77
      %p79 = scmp.eq.s32.totalorder %s23, 0
      %p80 = por %p78, %p79
      %s81 = ssub.s32 %s24, %s50
      %s82 = ssub.s32 %s26, %s42
      %s83 = sor.u32 %s81, %s82
      %s84 = ssub.s32 %s25, %s46
      %s85 = sor.u32 %s83, %s84
      %p86 = scmp.eq.s32.totalorder %s85, 0
      %s88 = sadd.s32 %s87, 1
      %s89 = scalar_select %p86, %s87, %s88
      %p92 = pneg %p86
      %p93 = scmp.eq.s32.totalorder %s17, 1
      %p94 = por %p92, %p93
      %p95 = scmp.ne.s32.totalorder %s87, %s90
      %p96 = scmp.eq.s32.totalorder %s17, 0
      %p97 = por %p95, %p96
      %p98 = scmp.ne.s32.totalorder %s87, %s90
      %p99 = scmp.eq.s32.totalorder %s22, 1
      %p100 = por %p98, %p99
      %p101 = scmp.ne.s32.totalorder %s90, %s91
      %p102 = scmp.eq.s32.totalorder %s22, 0
      %p103 = por %p101, %p102
      %p104 = scmp.ne.s32.totalorder %s90, %s91
      %p105 = scmp.eq.s32.totalorder %s23, 1
      %p106 = por %p104, %p105
      %p108 = scmp.ne.s32.totalorder %s91, %s107
      %p109 = scmp.eq.s32.totalorder %s23, 0
      %p110 = por %p108, %p109
      %s111 = ssub.s32 %s24, %s50
      %s112 = ssub.s32 %s26, %s42
      %s113 = sor.u32 %s111, %s112
      %s114 = ssub.s32 %s25, %s46
      %s115 = sor.u32 %s113, %s114
      %p116 = scmp.eq.s32.totalorder %s115, 0
      %s118 = sadd.s32 %s117, 1
      %s119 = scalar_select %p116, %s117, %s118
      %p122 = pneg %p116
      %p123 = scmp.eq.s32.totalorder %s17, 1
      %p124 = por %p122, %p123
      %p125 = scmp.ne.s32.totalorder %s117, %s120
      %p126 = scmp.eq.s32.totalorder %s17, 0
      %p127 = por %p125, %p126
      %p128 = scmp.ne.s32.totalorder %s117, %s120
      %p129 = scmp.eq.s32.totalorder %s22, 1
      %p130 = por %p128, %p129
      %p131 = scmp.ne.s32.totalorder %s120, %s121
      %p132 = scmp.eq.s32.totalorder %s22, 0
      %p133 = por %p131, %p132
      %p134 = scmp.ne.s32.totalorder %s120, %s121
      %p135 = scmp.eq.s32.totalorder %s23, 1
      %p136 = por %p134, %p135
      %p138 = scmp.ne.s32.totalorder %s121, %s137
      %p139 = scmp.eq.s32.totalorder %s23, 0
      %p140 = por %p138, %p139
      %p141 = scmp.le.s32.totalorder 1, %s17
      %p142 = scmp.lt.s32.totalorder %s17, 3
      %p143 = pnand %p141, %p142
      %p144 = pneg %p143
      // Predicated region
      $region9: #{tpu_custom_call.1} parent=5 // pred_check
        _
      $region10: #{tpu_custom_call.1} parent=5 // pred_check_branch
        %146 = sbr.rel (%p143) target = $region12
      $region11: #{tpu_custom_call.1} parent=5 // pred_region
        %s147 = ssub.s32 %s17, 1
      $region12: #{tpu_custom_call.1} parent=5 // pred_fallthru
        _
      %p148 = scmp.lt.s32.totalorder %s17, 2
      // Predicated region
      $region13: #{tpu_custom_call.1} parent=5 // pred_check
        %p149 = pneg %p148
      $region14: #{tpu_custom_call.1} parent=5 // pred_check_branch
        %151 = sbr.rel (%p149) target = $region16
      $region15: #{tpu_custom_call.1} parent=5 // pred_region
        // Predicated region
        $region17: #{tpu_custom_call.1} parent=15 // pred_check
          %p152 = pneg %p67
        $region18: #{tpu_custom_call.1} parent=15 // pred_check_branch
          %154 = sbr.rel (%p152) target = $region20
        $region19: #{tpu_custom_call.1} parent=15 // pred_region
          %s155 = sand.u32 %s57, 1
          %s156 = scalar_lea.sflag [#allocation3], %s155
          %s157 = sand.u32 %s57, 1
          %s158 = smul.addr %s157, 8
          %s159 = scalar_lea.vmem [#allocation2], %s158
          %s160 = smul.u32 2, %s25
          %s162 = ssub.s32 128, 128
          %163 = vsyncadd %s156, %s162
          %s164 = smul.addr %s27, 2
          %s165 = sadd.s32 %s160, %s164
          %s166 = smul.addr %s24, 2
          %s167 = sadd.s32 %s165, %s166
          %s168 = smul.addr %s167, 64
          %s169 = scalar_lea.hbm %s0, %s168
          %s171 = sshll.u32 %s159, 4
          %s172 = int_to_ptr.vmem [resolvable:$true] %s171
          %174 = dma.hbm_to_vmem [thread:$0]  %s169, 128, %s172, %s156
        $region20: #{tpu_custom_call.1} parent=15 // pred_fallthru
          _
        // Predicated region
        $region21: #{tpu_custom_call.1} parent=15 // pred_check
          %p175 = pneg %p97
        $region22: #{tpu_custom_call.1} parent=15 // pred_check_branch
          %177 = sbr.rel (%p175) target = $region24
        $region23: #{tpu_custom_call.1} parent=15 // pred_region
          %s178 = sand.u32 %s87, 1
          %s179 = scalar_lea.sflag [#allocation6], %s178
          %s180 = sand.u32 %s87, 1
          %s181 = smul.addr %s180, 8
          %s182 = scalar_lea.vmem [#allocation5], %s181
          %s183 = smul.u32 2, %s25
          %s185 = ssub.s32 128, 128
          %186 = vsyncadd %s179, %s185
          %s187 = smul.addr %s26, 2
          %s188 = sadd.s32 %s183, %s187
          %s189 = smul.addr %s24, 2
          %s190 = sadd.s32 %s188, %s189
          %s191 = smul.addr %s190, 64
          %s192 = scalar_lea.hbm %s1, %s191
          %s194 = sshll.u32 %s182, 4
          %s195 = int_to_ptr.vmem [resolvable:$true] %s194
          %197 = dma.hbm_to_vmem [thread:$0]  %s192, 128, %s195, %s179
        $region24: #{tpu_custom_call.1} parent=15 // pred_fallthru
          _
      $region16: #{tpu_custom_call.1} parent=5 // pred_fallthru
        _
      %p198 = scmp.le.s32.totalorder 1, %s17
      %p199 = scmp.lt.s32.totalorder %s17, 3
      %p200 = pnand %p198, %p199
      %p201 = pneg %p200
      // Predicated region
      $region25: #{tpu_custom_call.1} parent=5 // pred_check
        _
      $region26: #{tpu_custom_call.1} parent=5 // pred_check_branch
        %203 = sbr.rel (%p200) target = $region28
      $region27: #{tpu_custom_call.1} parent=5 // pred_region
        %s204 = ssub.s32 %s17, 1
        %s205 = sand.u32 %s60, 1
        %s206 = scalar_lea.sflag [#allocation3], %s205
        %s207 = sand.u32 %s60, 1
        %s208 = smul.addr %s207, 8
        %s209 = scalar_lea.vmem [#allocation2], %s208
        // Predicated region
        $region29: #{tpu_custom_call.1} parent=27 // pred_check
          %p210 = pneg %p73
        $region30: #{tpu_custom_call.1} parent=27 // pred_check_branch
          %212 = sbr.rel (%p210) target = $region32
        $region31: #{tpu_custom_call.1} parent=27 // pred_region
          %213 = dma.done %s206, 128
        $region32: #{tpu_custom_call.1} parent=27 // pred_fallthru
          _
        %s214 = sand.u32 %s90, 1
        %s215 = scalar_lea.sflag [#allocation6], %s214
        %s216 = sand.u32 %s90, 1
        %s217 = smul.addr %s216, 8
        %s218 = scalar_lea.vmem [#allocation5], %s217
        // Predicated region
        $region33: #{tpu_custom_call.1} parent=27 // pred_check
          %p219 = pneg %p103
        $region34: #{tpu_custom_call.1} parent=27 // pred_check_branch
          %221 = sbr.rel (%p219) target = $region36
        $region35: #{tpu_custom_call.1} parent=27 // pred_region
          %222 = dma.done %s215, 128
        $region36: #{tpu_custom_call.1} parent=27 // pred_fallthru
          _
        %s223 = sand.u32 %s60, 1
        %s224 = scalar_lea.sflag [#allocation3], %s223
        %s225 = sand.u32 %s60, 1
        %s226 = smul.addr %s225, 8
        %s227 = scalar_lea.vmem [#allocation2], %s226
        %p228 = pneg %p73
        %p229 = pneg %p70
        %s230 = sand.u32 %s90, 1
        %s231 = scalar_lea.sflag [#allocation6], %s230
        %s232 = sand.u32 %s90, 1
        %s233 = smul.addr %s232, 8
        %s234 = scalar_lea.vmem [#allocation5], %s233
        %p235 = pneg %p103
        %p236 = pneg %p100
        %p237 = pneg %p133
        %p238 = pneg %p130
        %s239 = sand.u32 %s120, 1
        %s240 = scalar_lea.sflag [#allocation4], %s239
        %s241 = sand.u32 %s120, 1
        %s242 = smul.addr %s241, 8
        %s243 = scalar_lea.vmem [#allocation7], %s242
        %s244 = smul.u32 2, %s29
        %s245 = smul.u32 2, %s29
        %s246 = smul.u32 2, %s29
        %v247 = vld [vmem:[%s218] sm:$0xff]
        %vm248 = vcmp.lt.s32.totalorder %v247, 0
        %v249 = vadd.s32 %v247, 4
        %v250 = vsel %vm248, %v249, %v247
        %v251 = vld [vmem:[%s209] sm:$0xff]
        %vm252 = vcmp.eq.s32.totalorder %v250, 0
        %v254 = vlaneseq
        %v255 = vshrl.u32 %v254, 7
        %v256 = vsub.s32 0, %v255
        %v257 = vrot.slane %v251, %v256
        %v258 = vlaneseq
        %v259 = vshrl.u32 %v258, 7
        %v260 = vsub.s32 4, %v259
        %v261 = vrot.slane %v251, %v260
        %v264 = vlaneseq
        %v265 = vshrl.u32 %v264, 7
        %v266 = vsub.s32 0, %v265
        %v267 = vrot.slane %v257, %v266
        %v268 = vlaneseq
        %v269 = vshrl.u32 %v268, 7
        %v270 = vsub.s32 0, %v269
        %v271 = vrot.slane %v261, %v270
        %v274 = vcombine.low %v267, %v271
        %v276 = vsel %vm252, %v274, 0.0
        %vm277 = vcmp.eq.s32.totalorder %v250, 1
        %v278 = vlaneseq
        %v279 = vshrl.u32 %v278, 7
        %v280 = vsub.s32 1, %v279
        %v281 = vrot.slane %v251, %v280
        %v282 = vlaneseq
        %v283 = vshrl.u32 %v282, 7
        %v284 = vsub.s32 5, %v283
        %v285 = vrot.slane %v251, %v284
        %v288 = vlaneseq
        %v289 = vshrl.u32 %v288, 7
        %v290 = vsub.s32 1, %v289
        %v291 = vrot.slane %v281, %v290
        %v292 = vlaneseq
        %v293 = vshrl.u32 %v292, 7
        %v294 = vsub.s32 1, %v293
        %v295 = vrot.slane %v285, %v294
        %v298 = vcombine.low %v291, %v295
        %v300 = vsel %vm277, %v298, %v276
        %vm301 = vcmp.eq.s32.totalorder %v250, 2
        %v302 = vlaneseq
        %v303 = vshrl.u32 %v302, 7
        %v304 = vsub.s32 2, %v303
        %v305 = vrot.slane %v251, %v304
        %v306 = vlaneseq
        %v307 = vshrl.u32 %v306, 7
        %v308 = vsub.s32 6, %v307
        %v309 = vrot.slane %v251, %v308
        %v312 = vlaneseq
        %v313 = vshrl.u32 %v312, 7
        %v314 = vsub.s32 2, %v313
        %v315 = vrot.slane %v305, %v314
        %v316 = vlaneseq
        %v317 = vshrl.u32 %v316, 7
        %v318 = vsub.s32 2, %v317
        %v319 = vrot.slane %v309, %v318
        %v322 = vcombine.low %v315, %v319
        %v324 = vsel %vm301, %v322, %v300
        %vm325 = vcmp.eq.s32.totalorder %v250, 3
        %v326 = vlaneseq
        %v327 = vshrl.u32 %v326, 7
        %v328 = vsub.s32 3, %v327
        %v329 = vrot.slane %v251, %v328
        %v330 = vlaneseq
        %v331 = vshrl.u32 %v330, 7
        %v332 = vsub.s32 7, %v331
        %v333 = vrot.slane %v251, %v332
        %v336 = vlaneseq
        %v337 = vshrl.u32 %v336, 7
        %v338 = vsub.s32 3, %v337
        %v339 = vrot.slane %v329, %v338
        %v340 = vlaneseq
        %v341 = vshrl.u32 %v340, 7
        %v342 = vsub.s32 3, %v341
        %v343 = vrot.slane %v333, %v342
        %v346 = vcombine.low %v339, %v343
        %v348 = vsel %vm325, %v346, %v324
        %349 = vst [vmem:[%s243] sm:$0xff] %v348
        %s350 = sand.u32 %s120, 1
        %s351 = scalar_lea.sflag [#allocation4], %s350
        %s352 = sand.u32 %s120, 1
        %s353 = smul.addr %s352, 8
        %s354 = scalar_lea.vmem [#allocation7], %s353
        // Predicated region
        $region37: #{tpu_custom_call.1} parent=27 // pred_check
          %p355 = pneg %p130
        $region38: #{tpu_custom_call.1} parent=27 // pred_check_branch
          %357 = sbr.rel (%p355) target = $region40
        $region39: #{tpu_custom_call.1} parent=27 // pred_region
          %s358 = smul.u32 2, %s29
          %s360 = ssub.s32 128, 128
          %361 = vsyncadd %s351, %s360
          %s362 = smul.addr %s30, 2
          %s363 = sadd.s32 %s358, %s362
          %s364 = smul.addr %s28, 2
          %s365 = sadd.s32 %s363, %s364
          %s366 = smul.addr %s365, 64
          %s367 = scalar_lea.hbm %s2, %s366
          %s369 = sshll.u32 %s354, 4
          %s370 = int_to_ptr.vmem [resolvable:$true] %s369
          %372 = dma.vmem_to_hbm [thread:$0]  %s370, 128, %s367, %s351
        $region40: #{tpu_custom_call.1} parent=27 // pred_fallthru
          _
      $region28: #{tpu_custom_call.1} parent=5 // pred_fallthru
        _
      %p373 = scmp.le.s32.totalorder 2, %s17
      // Predicated region
      $region41: #{tpu_custom_call.1} parent=5 // pred_check
        %p374 = pneg %p373
      $region42: #{tpu_custom_call.1} parent=5 // pred_check_branch
        %376 = sbr.rel (%p374) target = $region44
      $region43: #{tpu_custom_call.1} parent=5 // pred_region
        %s377 = ssub.s32 %s17, 2
        // Predicated region
        $region45: #{tpu_custom_call.1} parent=43 // pred_check
          %p378 = pneg %p136
        $region46: #{tpu_custom_call.1} parent=43 // pred_check_branch
          %380 = sbr.rel (%p378) target = $region48
        $region47: #{tpu_custom_call.1} parent=43 // pred_region
          %s381 = sand.u32 %s121, 1
          %s382 = scalar_lea.sflag [#allocation4], %s381
          %s383 = sand.u32 %s121, 1
          %s384 = smul.addr %s383, 8
          %s385 = scalar_lea.vmem [#allocation7], %s384
          %386 = dma.done %s382, 128
        $region48: #{tpu_custom_call.1} parent=43 // pred_fallthru
          _
      $region44: #{tpu_custom_call.1} parent=5 // pred_fallthru
        _
    $region6: #{tpu_custom_call.1} parent=1 // loop_footer
      %s21 = sadd.s32 1, %s17
    $region7: #{tpu_custom_call.1} parent=1 // loop_footer_branch
      %16 = sbr.rel target = $region3
    $region8: #{tpu_custom_call.1} parent=1 // loop_exit
      _
    %387 = vsyncpa [#allocation3], 1
    %s388 = scalar_lea.sflag [#allocation3], 1
    %389 = vsyncpa %s388, 1
    %390 = vsyncpa [#allocation6], 1
    %s391 = scalar_lea.sflag [#allocation6], 1
    %392 = vsyncpa %s391, 1
    %393 = vsyncpa [#allocation4], 1
    %s394 = scalar_lea.sflag [#allocation4], 1
    %395 = vsyncpa %s394, 1

</llo_original>
